<compile_context>
chip_gen: v5e
topology: v5e:2x2
jax: 0.10.0
libtpu: 0.0.40
codegen_flags: <defaults>
</compile_context>

<pallas_src>
import jax
import jax.numpy as jnp
import numpy as np
from jax.experimental import pallas as pl
from jax.experimental.pallas import tpu as pltpu


def _film_kernel(g_ref, b_ref, x_ref, out_ref):
    # g_ref, b_ref: (r_t, 1, 1) f32 — broadcast over sublanes (H) and lanes (W).
    # x_ref, out_ref: (r_t, h_t, W)
    out_ref[...] = (g_ref[...] * x_ref[...] + b_ref[...]).astype(out_ref.dtype)


def _pick_block_3d(R, H, W, itemsize, target_bytes=3 << 20):
    """Pick (r_t, h_t) for blocks (r_t, h_t, W) over a (R, H, W) slab.

    h_t is a multiple of the native sublane packing (8/16/32 for 4/2/1-byte
    dtypes) or the full H; W (lane dim) is always full.  Ensures >= 2 blocks
    along a 'parallel' axis when possible (v7x dual-TensorCore sharding).
    """
    pack = {1: 32, 2: 16, 4: 8}.get(itemsize, 8)
    plane_bytes = H * W * itemsize

    if plane_bytes <= target_bytes:
        h_t = H
        r_t = int(max(1, min(R, target_bytes // plane_bytes)))
    else:
        r_t = 1
        rows_budget = max(1, target_bytes // (W * itemsize))
        if rows_budget >= H:
            h_t = H
        else:
            h_t = int(max(pack, (rows_budget // pack) * pack))
            h_t = min(h_t, H)   # if clamped to H it is the full dim (allowed)

    # Guarantee >= 2 blocks so ("parallel", "parallel") can feed both v7x TCs.
    if pl.cdiv(R, r_t) * pl.cdiv(H, h_t) < 2:
        if R >= 2:
            r_t = -(-R // 2)                       # ceil(R/2) -> 2 row tiles
        elif H >= 2 * pack and h_t == H:
            h_t = ((-(-H // 2) + pack - 1) // pack) * pack
    return int(r_t), int(h_t)


def film_layer_separated(input_features, rnn_last_hidden_state,
                         gamma_w, gamma_b, beta_w, beta_b,
                         film_layer_transformation=None,
                         force_pallas=False):
    """FiLM layer (separated projections).

    input_features:        (B, C, H, W)  NCHW
    rnn_last_hidden_state: (B, IN)
    gamma_w, beta_w:       (C, IN)  (PyTorch nn.Linear weight layout)
    gamma_b, beta_b:       (C,)
    Returns: (output (B,C,H,W), gammas (B,C), betas (B,C))
    """
    B, C, H, W = input_features.shape
    R = B * C
    dtype = input_features.dtype
    itemsize = jnp.dtype(dtype).itemsize

    # Hoisted projections: one well-shaped (B, IN) @ (IN, 2C) matmul in XLA.
    w_cat = jnp.concatenate([gamma_w, beta_w], axis=0)                # (2C, IN)
    b_cat = jnp.concatenate([gamma_b, beta_b], axis=0)                # (2C,)
    gb = (rnn_last_hidden_state.astype(jnp.float32)
          @ w_cat.astype(jnp.float32).T) + b_cat.astype(jnp.float32)  # (B, 2C)
    gammas = gb[:, :C]                                                # (B, C) f32
    betas = gb[:, C:]                                                 # (B, C) f32

    # Fold the 'plus' transform into gamma once; kernel always runs g*x + b.
    g_eff = gammas + 1.0 if film_layer_transformation == 'plus' else gammas

    gammas_out = gammas.astype(dtype)   # dtype parity with the torch module
    betas_out = betas.astype(dtype)

    total_bytes = R * H * W * itemsize

    # Small-tensor fast path: Pallas per-call/per-step overhead dominates tiny
    # feature maps; XLA elementwise fusion already hits the HBM roofline there.
    if not force_pallas and total_bytes < (1 << 20):
        out = (g_eff[:, :, None, None] * input_features.astype(jnp.float32)
               + betas[:, :, None, None]).astype(dtype)
        return out, gammas_out, betas_out

    # Leading-dim merge only (layout-preserving; no HBM relayout copy).
    x3 = input_features.reshape(R, H, W)
    g3 = g_eff.reshape(R, 1, 1)
    b3 = betas.reshape(R, 1, 1)

    r_t, h_t = _pick_block_3d(R, H, W, itemsize)
    grid = (pl.cdiv(R, r_t), pl.cdiv(H, h_t))

    # VMEM budget: double-buffered x block + double-buffered out block + slack.
    block_bytes = r_t * h_t * W * itemsize
    vmem_limit = int(min(32 << 20, max(16 << 20, 4 * block_bytes + (4 << 20))))

    cost = pl.CostEstimate(
        flops=2 * R * H * W,
        transcendentals=0,
        bytes_accessed=2 * total_bytes + 2 * R * 4,
    )

    out3 = pl.pallas_call(
        _film_kernel,
        out_shape=jax.ShapeDtypeStruct((R, H, W), dtype),
        grid_spec=pltpu.PrefetchScalarGridSpec(
            num_scalar_prefetch=0,
            grid=grid,
            in_specs=[
                # gamma/beta block index is constant over the inner (j) axis,
                # so Pallas does not re-DMA the columns each inner step.
                pl.BlockSpec((r_t, 1, 1), lambda i, j: (i, 0, 0)),   # gamma
                pl.BlockSpec((r_t, 1, 1), lambda i, j: (i, 0, 0)),   # beta
                pl.BlockSpec((r_t, h_t, W), lambda i, j: (i, j, 0)),  # features
            ],
            out_specs=pl.BlockSpec((r_t, h_t, W), lambda i, j: (i, j, 0)),
        ),
        compiler_params=pltpu.CompilerParams(
            dimension_semantics=("parallel", "parallel"),
            vmem_limit_bytes=vmem_limit),
        cost_estimate=cost,
    )(g3, b3, x3)

    # Dropout with p=0.0 is the identity -> no-op.
    return out3.reshape(B, C, H, W), gammas_out, betas_out


if __name__ == "__main__":
    # Small shapes consistent with the module's forward:
    #   input_features: (B, C, H, W), rnn hidden: (B, in_channels)
    B, C, H, W = 2, 4, 16, 16
    IN = 32  # in_channels (rnn hidden size); out_channels = C

    key = jax.random.PRNGKey(0)
    k1, k2, k3, k4, k5, k6 = jax.random.split(key, 6)

    x = jax.random.normal(k1, (B, C, H, W), dtype=jnp.float32)
    h = jax.random.normal(k2, (B, IN), dtype=jnp.float32)

    # Deterministic parameter init (nn.Linear-like uniform bound 1/sqrt(in))
    bound = 1.0 / np.sqrt(IN)
    gamma_w = jax.random.uniform(k3, (C, IN), minval=-bound, maxval=bound)
    gamma_b = jax.random.uniform(k4, (C,), minval=-bound, maxval=bound)
    beta_w = jax.random.uniform(k5, (C, IN), minval=-bound, maxval=bound)
    beta_b = jax.random.uniform(k6, (C,), minval=-bound, maxval=bound)

    # Pure-JAX reference
    g_ref = h @ gamma_w.T + gamma_b
    b_ref = h @ beta_w.T + beta_b

    # Branch 1: film_layer_transformation=None  (force the Pallas path)
    out, gammas, betas = film_layer_separated(
        x, h, gamma_w, gamma_b, beta_w, beta_b,
        film_layer_transformation=None, force_pallas=True)
    jax.block_until_ready(out)
    ref = g_ref[:, :, None, None] * x + b_ref[:, :, None, None]
    assert np.allclose(np.asarray(out), np.asarray(ref), atol=1e-5, rtol=1e-5)
    assert np.allclose(np.asarray(gammas), np.asarray(g_ref), atol=1e-5, rtol=1e-5)
    assert np.allclose(np.asarray(betas), np.asarray(b_ref), atol=1e-5, rtol=1e-5)

    # Branch 2: film_layer_transformation='plus'  (force the Pallas path)
    out_p, _, _ = film_layer_separated(
        x, h, gamma_w, gamma_b, beta_w, beta_b,
        film_layer_transformation='plus', force_pallas=True)
    jax.block_until_ready(out_p)
    ref_p = (1.0 + g_ref)[:, :, None, None] * x + b_ref[:, :, None, None]
    assert np.allclose(np.asarray(out_p), np.asarray(ref_p), atol=1e-5, rtol=1e-5)

    # Branch 3: auto small-tensor fast path (plain jnp) gives identical results.
    out_auto, _, _ = film_layer_separated(
        x, h, gamma_w, gamma_b, beta_w, beta_b,
        film_layer_transformation=None)
    jax.block_until_ready(out_auto)
    assert np.allclose(np.asarray(out_auto), np.asarray(ref), atol=1e-5, rtol=1e-5)

    print("KERNEL_OK")
</pallas_src>

<mosaic_0001>
module attributes {stable_mosaic.version = 11 : i64} {
  func.func @_film_kernel(%arg0: i32, %arg1: i32, %arg2: memref<4x1x1xf32, #tpu.memory_space<vmem>>, %arg3: memref<4x1x1xf32, #tpu.memory_space<vmem>>, %arg4: memref<4x16x16xf32, #tpu.memory_space<vmem>>, %arg5: memref<4x16x16xf32, #tpu.memory_space<vmem>>) attributes {dimension_semantics = [#tpu.dimension_semantics<parallel>, #tpu.dimension_semantics<parallel>], iteration_bounds = array<i64: 2, 1>, scalar_prefetch = 0 : i64, scratch_operands = 0 : i64, tpu.core_type = #tpu.core_type<tc>, window_params = [{transform_indices = @transform_0, window_bounds = array<i64: 4, 1, 1>}, {transform_indices = @transform_1, window_bounds = array<i64: 4, 1, 1>}, {transform_indices = @transform_2, window_bounds = array<i64: 4, 16, 16>}, {transform_indices = @transform_3, window_bounds = array<i64: 4, 16, 16>}]} {
    %c0 = arith.constant 0 : index
    %c0_0 = arith.constant 0 : index
    %c0_1 = arith.constant 0 : index
    %0 = vector.load %arg2[%c0, %c0_0, %c0_1] : memref<4x1x1xf32, #tpu.memory_space<vmem>>, vector<4x1x1xf32>
    %c0_2 = arith.constant 0 : index
    %c0_3 = arith.constant 0 : index
    %c0_4 = arith.constant 0 : index
    %1 = vector.load %arg4[%c0_2, %c0_3, %c0_4] : memref<4x16x16xf32, #tpu.memory_space<vmem>>, vector<4x16x16xf32>
    %2 = vector.broadcast %0 : vector<4x1x1xf32> to vector<4x16x16xf32>
    %3 = arith.mulf %2, %1 : vector<4x16x16xf32>
    %c0_5 = arith.constant 0 : index
    %c0_6 = arith.constant 0 : index
    %c0_7 = arith.constant 0 : index
    %4 = vector.load %arg3[%c0_5, %c0_6, %c0_7] : memref<4x1x1xf32, #tpu.memory_space<vmem>>, vector<4x1x1xf32>
    %5 = vector.broadcast %4 : vector<4x1x1xf32> to vector<4x16x16xf32>
    %6 = arith.addf %3, %5 : vector<4x16x16xf32>
    %c0_8 = arith.constant 0 : index
    %c0_9 = arith.constant 0 : index
    %c0_10 = arith.constant 0 : index
    %7 = vector.load %arg5[%c0_8, %c0_9, %c0_10] : memref<4x16x16xf32, #tpu.memory_space<vmem>>, vector<4x16x16xf32>
    tpu.vector_store %arg5[%c0_8, %c0_9, %c0_10], %6 {strides = array<i32>} : memref<4x16x16xf32, #tpu.memory_space<vmem>>, vector<4x16x16xf32>,
    return
  }
  func.func @transform_0(%arg0: i32, %arg1: i32) -> (i32, i32, i32) {
    %c0_i32 = arith.constant 0 : i32
    %c0_i32_0 = arith.constant 0 : i32
    %c0_i32_1 = arith.constant 0 : i32
    return %arg0, %c0_i32, %c0_i32_0 : i32, i32, i32
  }
  func.func @transform_1(%arg0: i32, %arg1: i32) -> (i32, i32, i32) {
    %c0_i32 = arith.constant 0 : i32
    %c0_i32_0 = arith.constant 0 : i32
    %c0_i32_1 = arith.constant 0 : i32
    return %arg0, %c0_i32, %c0_i32_0 : i32, i32, i32
  }
  func.func @transform_2(%arg0: i32, %arg1: i32) -> (i32, i32, i32) {
    %c0_i32 = arith.constant 0 : i32
    %c0_i32_0 = arith.constant 0 : i32
    return %arg0, %arg1, %c0_i32 : i32, i32, i32
  }
  func.func @transform_3(%arg0: i32, %arg1: i32) -> (i32, i32, i32) {
    %c0_i32 = arith.constant 0 : i32
    %c0_i32_0 = arith.constant 0 : i32
    return %arg0, %arg1, %c0_i32 : i32, i32, i32
  }
}

</mosaic_0001>

<llo_original>
// kernel: tpu_custom_call.1
$region0: #{tpu_custom_call.1}
  #allocation0 [shape = 'u32[]', space=smem, size = 0x4, offset = 0x4, fixed_abs, tag = 'smem constant byte address 0x4 - core index']
  #allocation1 [shape = 'u32[72,128]{1,0:T(1,128)}', space=vmem, size = 0x9000, scoped, tag = 'internal scratch']
  %s0 = inlined_call_operand.vmem [shape: f32[8,1,1], index: 0, kind: input, shape index: {}]
  %s1 = inlined_call_operand.vmem [shape: f32[8,1,1], index: 1, kind: input, shape index: {}]
  %s2 = inlined_call_operand.hbm [shape: f32[8,16,16], index: 2, kind: input, shape index: {}]
  %s3 = inlined_call_operand.hbm [shape: f32[8,16,16], index: 3, kind: output, shape index: {}]
  %s4 = sld [smem:[#allocation0]]
  $region49: #{tpu_custom_call.1} parent=0
    _
  %s6 = ssub.s32 1, %s4
  %s7 = scalar_select 0, %s6, %s4
  $region1: #{tpu_custom_call.1} parent=0
    #allocation2 [shape = 'u8[65536]{0}', space=vmem, size = 0x10000, scoped, tag = 'input window, operand 2']
    #allocation3 [shape = 's32[2]{0}', space=sflag, size = 0x8, scoped, tag = 'scoped memory for tpu_custom_call.1']
    #allocation4 [shape = 's32[2]{0}', space=sflag, size = 0x8, scoped, tag = 'scoped memory for tpu_custom_call.1']
    #allocation5 [shape = 'u8[65536]{0}', space=vmem, size = 0x10000, scoped, tag = 'output window, operand 0']
    %8 = vsyncpa [#allocation3], 0
    %s9 = scalar_lea.sflag [#allocation3], 1
    %10 = vsyncpa %s9, 0
    %11 = vsyncpa [#allocation4], 0
    %s12 = scalar_lea.sflag [#allocation4], 1
    %13 = vsyncpa %s12, 0
    loop: start=0, step=1, limit=4
    $region2: #{tpu_custom_call.1} parent=1 // loop_pre_header
      _
    $region3: #{tpu_custom_call.1} parent=1 // loop_header
      %s15 = sphi 0, %s19
      %p16 = scmp.ge.s32.totalorder %s15, 4
      %s22 = sphi 0, %s34
      %s23 = sphi 0, %s30
      %s24 = sphi 0, %s22
      %s25 = sphi 0, %s23
      %s26 = sphi 0, %s24
      %s27 = sphi 0, %s25
      %s37 = sphi 0, %s39
      %s40 = sphi 0, %s37
      %s41 = sphi 0, %s40
      %s57 = sphi 0, %s41
      %s63 = sphi 0, %s65
      %s66 = sphi 0, %s63
      %s67 = sphi 0, %s66
      %s83 = sphi 0, %s67
      %s91 = sphi 0, %s93
      %s94 = sphi 0, %s91
      %s95 = sphi 0, %s94
      %s111 = sphi 0, %s95
      %s119 = sphi 0, %s121
      %s122 = sphi 0, %s119
      %s123 = sphi 0, %s122
      %s139 = sphi 0, %s123
    $region4: #{tpu_custom_call.1} parent=1 // loop_header_branch
      %18 = sbr.rel (%p16) target = $region8
    $region5: #{tpu_custom_call.1} parent=1 // loop_body
      %s20 = ssub.s32 %s15, 1
      %s21 = ssub.s32 %s15, 2
      %s28 = sadd.s32 1, %s23
      %p29 = scmp.ge.s32.totalorder %s28, 1
      %s30 = scalar_select %p29, 0, %s28
      %s31 = sadd.s32 1, %s22
      %s32 = scalar_select %p29, %s31, %s22
      %p33 = scmp.ge.s32.totalorder %s32, 2
      %s34 = scalar_select %p33, 0, %s32
      %s35 = ssub.s32 %s22, %s34
      %p36 = scmp.eq.s32.totalorder %s35, 0
      %s38 = sadd.s32 %s37, 1
      %s39 = scalar_select %p36, %s37, %s38
      %p42 = pneg %p36
      %p43 = scmp.eq.s32.totalorder %s15, 1
      %p44 = por %p42, %p43
      %p45 = scmp.ne.s32.totalorder %s37, %s40
      %p46 = scmp.eq.s32.totalorder %s15, 0
      %p47 = por %p45, %p46
      %p48 = scmp.ne.s32.totalorder %s37, %s40
      %p49 = scmp.eq.s32.totalorder %s20, 1
      %p50 = por %p48, %p49
      %p51 = scmp.ne.s32.totalorder %s40, %s41
      %p52 = scmp.eq.s32.totalorder %s20, 0
      %p53 = por %p51, %p52
      %p54 = scmp.ne.s32.totalorder %s40, %s41
      %p55 = scmp.eq.s32.totalorder %s21, 1
      %p56 = por %p54, %p55
      %p58 = scmp.ne.s32.totalorder %s41, %s57
      %p59 = scmp.eq.s32.totalorder %s21, 0
      %p60 = por %p58, %p59
      %s61 = ssub.s32 %s22, %s34
      %p62 = scmp.eq.s32.totalorder %s61, 0
      %s64 = sadd.s32 %s63, 1
      %s65 = scalar_select %p62, %s63, %s64
      %p68 = pneg %p62
      %p69 = scmp.eq.s32.totalorder %s15, 1
      %p70 = por %p68, %p69
      %p71 = scmp.ne.s32.totalorder %s63, %s66
      %p72 = scmp.eq.s32.totalorder %s15, 0
      %p73 = por %p71, %p72
      %p74 = scmp.ne.s32.totalorder %s63, %s66
      %p75 = scmp.eq.s32.totalorder %s20, 1
      %p76 = por %p74, %p75
      %p77 = scmp.ne.s32.totalorder %s66, %s67
      %p78 = scmp.eq.s32.totalorder %s20, 0
      %p79 = por %p77, %p78
      %p80 = scmp.ne.s32.totalorder %s66, %s67
      %p81 = scmp.eq.s32.totalorder %s21, 1
      %p82 = por %p80, %p81
      %p84 = scmp.ne.s32.totalorder %s67, %s83
      %p85 = scmp.eq.s32.totalorder %s21, 0
      %p86 = por %p84, %p85
      %s87 = ssub.s32 %s22, %s34
      %s88 = ssub.s32 %s23, %s30
      %s89 = sor.u32 %s87, %s88
      %p90 = scmp.eq.s32.totalorder %s89, 0
      %s92 = sadd.s32 %s91, 1
      %s93 = scalar_select %p90, %s91, %s92
      %p96 = pneg %p90
      %p97 = scmp.eq.s32.totalorder %s15, 1
      %p98 = por %p96, %p97
      %p99 = scmp.ne.s32.totalorder %s91, %s94
      %p100 = scmp.eq.s32.totalorder %s15, 0
      %p101 = por %p99, %p100
      %p102 = scmp.ne.s32.totalorder %s91, %s94
      %p103 = scmp.eq.s32.totalorder %s20, 1
      %p104 = por %p102, %p103
      %p105 = scmp.ne.s32.totalorder %s94, %s95
      %p106 = scmp.eq.s32.totalorder %s20, 0
      %p107 = por %p105, %p106
      %p108 = scmp.ne.s32.totalorder %s94, %s95
      %p109 = scmp.eq.s32.totalorder %s21, 1
      %p110 = por %p108, %p109
      %p112 = scmp.ne.s32.totalorder %s95, %s111
      %p113 = scmp.eq.s32.totalorder %s21, 0
      %p114 = por %p112, %p113
      %s115 = ssub.s32 %s22, %s34
      %s116 = ssub.s32 %s23, %s30
      %s117 = sor.u32 %s115, %s116
      %p118 = scmp.eq.s32.totalorder %s117, 0
      %s120 = sadd.s32 %s119, 1
      %s121 = scalar_select %p118, %s119, %s120
      %p124 = pneg %p118
      %p125 = scmp.eq.s32.totalorder %s15, 1
      %p126 = por %p124, %p125
      %p127 = scmp.ne.s32.totalorder %s119, %s122
      %p128 = scmp.eq.s32.totalorder %s15, 0
      %p129 = por %p127, %p128
      %p130 = scmp.ne.s32.totalorder %s119, %s122
      %p131 = scmp.eq.s32.totalorder %s20, 1
      %p132 = por %p130, %p131
      %p133 = scmp.ne.s32.totalorder %s122, %s123
      %p134 = scmp.eq.s32.totalorder %s20, 0
      %p135 = por %p133, %p134
      %p136 = scmp.ne.s32.totalorder %s122, %s123
      %p137 = scmp.eq.s32.totalorder %s21, 1
      %p138 = por %p136, %p137
      %p140 = scmp.ne.s32.totalorder %s123, %s139
      %p141 = scmp.eq.s32.totalorder %s21, 0
      %p142 = por %p140, %p141
      %p143 = scmp.le.s32.totalorder 1, %s15
      %p144 = scmp.lt.s32.totalorder %s15, 3
      %p145 = pnand %p143, %p144
      %p146 = pneg %p145
      // Predicated region
      $region9: #{tpu_custom_call.1} parent=5 // pred_check
        _
      $region10: #{tpu_custom_call.1} parent=5 // pred_check_branch
        %148 = sbr.rel (%p145) target = $region12
      $region11: #{tpu_custom_call.1} parent=5 // pred_region
        %s149 = ssub.s32 %s15, 1
      $region12: #{tpu_custom_call.1} parent=5 // pred_fallthru
        _
      %p150 = scmp.lt.s32.totalorder %s15, 2
      // Predicated region
      $region13: #{tpu_custom_call.1} parent=5 // pred_check
        %p151 = pneg %p150
      $region14: #{tpu_custom_call.1} parent=5 // pred_check_branch
        %153 = sbr.rel (%p151) target = $region16
      $region15: #{tpu_custom_call.1} parent=5 // pred_region
        // Predicated region
        $region17: #{tpu_custom_call.1} parent=15 // pred_check
          %p154 = pneg %p47
        $region18: #{tpu_custom_call.1} parent=15 // pred_check_branch
          %156 = sbr.rel (%p154) target = $region20
        $region19: #{tpu_custom_call.1} parent=15 // pred_region
          %s157 = smul.u32 4, %s22
          %p158 = scmp.lt.s32.totalorder %s157, 7
          %s159 = scalar_select %p158, %s157, 7
          %s160 = scalar_lea.vmem %s0, %s159
          %s161 = smul.u32 4, %s22
        $region20: #{tpu_custom_call.1} parent=15 // pred_fallthru
          _
        // Predicated region
        $region21: #{tpu_custom_call.1} parent=15 // pred_check
          %p162 = pneg %p73
        $region22: #{tpu_custom_call.1} parent=15 // pred_check_branch
          %164 = sbr.rel (%p162) target = $region24
        $region23: #{tpu_custom_call.1} parent=15 // pred_region
          %s165 = smul.u32 4, %s22
          %p166 = scmp.lt.s32.totalorder %s165, 7
          %s167 = scalar_select %p166, %s165, 7
          %s168 = scalar_lea.vmem %s1, %s167
          %s169 = smul.u32 4, %s22
        $region24: #{tpu_custom_call.1} parent=15 // pred_fallthru
          _
        // Predicated region
        $region25: #{tpu_custom_call.1} parent=15 // pred_check
          %p170 = pneg %p101
        $region26: #{tpu_custom_call.1} parent=15 // pred_check_branch
          %172 = sbr.rel (%p170) target = $region28
        $region27: #{tpu_custom_call.1} parent=15 // pred_region
          %s173 = sand.u32 %s91, 1
          %s174 = scalar_lea.sflag [#allocation3], %s173
          %s175 = sand.u32 %s91, 1
          %s176 = smul.addr %s175, 64
          %s177 = scalar_lea.vmem [#allocation2], %s176
          %s178 = smul.u32 4, %s22
          %s179 = smul.u32 2, %s23
          %181 = vsyncadd %s174, 0
          %s182 = smul.addr %s178, 2
          %s183 = sadd.s32 %s179, %s182
          %s184 = smul.addr %s183, 8
          %s185 = scalar_lea.hbm %s2, %s184
          %s186 = sshll.u32 %s185, 4
          %s187 = int_to_ptr.hbm [resolvable:$true] %s186
          %s188 = sshll.u32 %s177, 4
          %s189 = int_to_ptr.vmem [resolvable:$true] %s188
          %194 = dma.hbm_to_vmem [thread:$0]  %s187, 1024, %s189, %s174, 128, 128, 8
        $region28: #{tpu_custom_call.1} parent=15 // pred_fallthru
          _
      $region16: #{tpu_custom_call.1} parent=5 // pred_fallthru
        _
      %p195 = scmp.le.s32.totalorder 1, %s15
      %p196 = scmp.lt.s32.totalorder %s15, 3
      %p197 = pnand %p195, %p196
      %p198 = pneg %p197
      // Predicated region
      $region29: #{tpu_custom_call.1} parent=5 // pred_check
        _
      $region30: #{tpu_custom_call.1} parent=5 // pred_check_branch
        %200 = sbr.rel (%p197) target = $region32
      $region31: #{tpu_custom_call.1} parent=5 // pred_region
        %s201 = ssub.s32 %s15, 1
        %s202 = sand.u32 %s94, 1
        %s203 = scalar_lea.sflag [#allocation3], %s202
        %s204 = sand.u32 %s94, 1
        %s205 = smul.addr %s204, 64
        %s206 = scalar_lea.vmem [#allocation2], %s205
        // Predicated region
        $region33: #{tpu_custom_call.1} parent=31 // pred_check
          %p207 = pneg %p107
        $region34: #{tpu_custom_call.1} parent=31 // pred_check_branch
          %209 = sbr.rel (%p207) target = $region36
        $region35: #{tpu_custom_call.1} parent=31 // pred_region
          %211 = dma.done %s203, 1024
        $region36: #{tpu_custom_call.1} parent=31 // pred_fallthru
          _
        %s212 = smul.u32 4, %s24
        %p213 = scmp.lt.s32.totalorder %s212, 7
        %s214 = scalar_select %p213, %s212, 7
        %s215 = scalar_lea.vmem %s0, %s214
        %p216 = pneg %p53
        %p217 = pneg %p50
        %s218 = smul.u32 4, %s24
        %p219 = scmp.lt.s32.totalorder %s218, 7
        %s220 = scalar_select %p219, %s218, 7
        %s221 = scalar_lea.vmem %s1, %s220
        %p222 = pneg %p79
        %p223 = pneg %p76
        %s224 = sand.u32 %s94, 1
        %s225 = scalar_lea.sflag [#allocation3], %s224
        %s226 = sand.u32 %s94, 1
        %s227 = smul.addr %s226, 64
        %s228 = scalar_lea.vmem [#allocation2], %s227
        %p229 = pneg %p107
        %p230 = pneg %p104
        %p231 = pneg %p135
        %p232 = pneg %p132
        %s233 = sand.u32 %s122, 1
        %s234 = scalar_lea.sflag [#allocation4], %s233
        %s235 = sand.u32 %s122, 1
        %s236 = smul.addr %s235, 64
        %s237 = scalar_lea.vmem [#allocation5], %s236
        %s238 = smul.u32 4, %s24
        %p239 = scmp.lt.s32.totalorder %s238, 7
        %s240 = scalar_select %p239, %s238, 7
        %s241 = scalar_lea.vmem %s0, %s240
        %s242 = smul.u32 4, %s24
        %s243 = smul.u32 4, %s24
        %p244 = scmp.lt.s32.totalorder %s243, 7
        %s245 = scalar_select %p244, %s243, 7
        %s246 = scalar_lea.vmem %s1, %s245
        %s247 = smul.u32 4, %s24
        %s248 = smul.u32 4, %s24
        %s249 = smul.u32 2, %s25
        %s250 = smul.u32 4, %s24
        %s251 = smul.u32 2, %s25
        %v252 = vld [vmem:[%s241] sm:$0x1]
        %v253 = vld [vmem:[%s241 + $0x1] sm:$0x1]
        %v254 = vld [vmem:[%s241 + $0x2] sm:$0x1]
        %v255 = vld [vmem:[%s241 + $0x3] sm:$0x1]
        %v256 = vld [vmem:[%s206] sm:$0xff]
        %v257 = vld [vmem:[%s206 + $0x8] sm:$0xff]
        %v258 = vld [vmem:[%s206 + $0x10] sm:$0xff]
        %v259 = vld [vmem:[%s206 + $0x18] sm:$0xff]
        %v260 = vld [vmem:[%s206 + $0x20] sm:$0xff]
        %v261 = vld [vmem:[%s206 + $0x28] sm:$0xff]
        %v262 = vld [vmem:[%s206 + $0x30] sm:$0xff]
        %v263 = vld [vmem:[%s206 + $0x38] sm:$0xff]
        %v268 = vperm.slane %v252, 0
        %v269 = vperm.slane %v253, 0
        %v270 = vperm.slane %v254, 0
        %v271 = vperm.slane %v255, 0
        %272 = vset.pattern.permute.xlu0 0
        %273 = vperm.xlu0 %272, %v268
        %v274 = vpop.permute.xlu0 %273
        %276 = vset.pattern.permute.xlu0 0
        %277 = vperm.xlu0 %276, %v269
        %v278 = vpop.permute.xlu0 %277
        %280 = vset.pattern.permute.xlu0 0
        %281 = vperm.xlu0 %280, %v270
        %v282 = vpop.permute.xlu0 %281
        %284 = vset.pattern.permute.xlu0 0
        %285 = vperm.xlu0 %284, %v271
        %v286 = vpop.permute.xlu0 %285
        %v288 = vmul.f32 %v274, %v256
        %v289 = vmul.f32 %v274, %v257
        %v290 = vmul.f32 %v278, %v258
        %v291 = vmul.f32 %v278, %v259
        %v292 = vmul.f32 %v282, %v260
        %v293 = vmul.f32 %v282, %v261
        %v294 = vmul.f32 %v286, %v262
        %v295 = vmul.f32 %v286, %v263
        %v296 = vld [vmem:[%s246] sm:$0x1]
        %v297 = vld [vmem:[%s246 + $0x1] sm:$0x1]
        %v298 = vld [vmem:[%s246 + $0x2] sm:$0x1]
        %v299 = vld [vmem:[%s246 + $0x3] sm:$0x1]
        %v304 = vperm.slane %v296, 0
        %v305 = vperm.slane %v297, 0
        %v306 = vperm.slane %v298, 0
        %v307 = vperm.slane %v299, 0
        %308 = vset.pattern.permute.xlu0 0
        %309 = vperm.xlu0 %308, %v304
        %v310 = vpop.permute.xlu0 %309
        %312 = vset.pattern.permute.xlu0 0
        %313 = vperm.xlu0 %312, %v305
        %v314 = vpop.permute.xlu0 %313
        %316 = vset.pattern.permute.xlu0 0
        %317 = vperm.xlu0 %316, %v306
        %v318 = vpop.permute.xlu0 %317
        %320 = vset.pattern.permute.xlu0 0
        %321 = vperm.xlu0 %320, %v307
        %v322 = vpop.permute.xlu0 %321
        %v324 = vadd.f32 %v288, %v310
        %v325 = vadd.f32 %v289, %v310
        %v326 = vadd.f32 %v290, %v314
        %v327 = vadd.f32 %v291, %v314
        %v328 = vadd.f32 %v292, %v318
        %v329 = vadd.f32 %v293, %v318
        %v330 = vadd.f32 %v294, %v322
        %v331 = vadd.f32 %v295, %v322
        %vm332 = vcmask 130048
        %333 = vst.msk [vmem:[%s237] sm:$0xff] %vm332, %v324
        %334 = vst.msk [vmem:[%s237 + $0x8] sm:$0xff] %vm332, %v325
        %335 = vst.msk [vmem:[%s237 + $0x10] sm:$0xff] %vm332, %v326
        %336 = vst.msk [vmem:[%s237 + $0x18] sm:$0xff] %vm332, %v327
        %337 = vst.msk [vmem:[%s237 + $0x20] sm:$0xff] %vm332, %v328
        %338 = vst.msk [vmem:[%s237 + $0x28] sm:$0xff] %vm332, %v329
        %339 = vst.msk [vmem:[%s237 + $0x30] sm:$0xff] %vm332, %v330
        %340 = vst.msk [vmem:[%s237 + $0x38] sm:$0xff] %vm332, %v331
        %s341 = sand.u32 %s122, 1
        %s342 = scalar_lea.sflag [#allocation4], %s341
        %s343 = sand.u32 %s122, 1
        %s344 = smul.addr %s343, 64
        %s345 = scalar_lea.vmem [#allocation5], %s344
        // Predicated region
        $region37: #{tpu_custom_call.1} parent=31 // pred_check
          %p346 = pneg %p132
        $region38: #{tpu_custom_call.1} parent=31 // pred_check_branch
          %348 = sbr.rel (%p346) target = $region40
        $region39: #{tpu_custom_call.1} parent=31 // pred_region
          %s349 = smul.u32 4, %s24
          %s350 = smul.u32 2, %s25
          %352 = vsyncadd %s342, 0
          %s353 = smul.addr %s349, 2
          %s354 = sadd.s32 %s350, %s353
          %s355 = smul.addr %s354, 8
          %s356 = scalar_lea.hbm %s3, %s355
          %s357 = sshll.u32 %s345, 4
          %s358 = int_to_ptr.vmem [resolvable:$true] %s357
          %s359 = sshll.u32 %s356, 4
          %s360 = int_to_ptr.hbm [resolvable:$true] %s359
          %365 = dma.vmem_to_hbm [thread:$0]  %s358, 1024, %s360, %s342, 128, 128, 8
        $region40: #{tpu_custom_call.1} parent=31 // pred_fallthru
          _
      $region32: #{tpu_custom_call.1} parent=5 // pred_fallthru
        _
      %p366 = scmp.le.s32.totalorder 2, %s15
      // Predicated region
      $region41: #{tpu_custom_call.1} parent=5 // pred_check
        %p367 = pneg %p366
      $region42: #{tpu_custom_call.1} parent=5 // pred_check_branch
        %369 = sbr.rel (%p367) target = $region44
      $region43: #{tpu_custom_call.1} parent=5 // pred_region
        %s370 = ssub.s32 %s15, 2
        // Predicated region
        $region45: #{tpu_custom_call.1} parent=43 // pred_check
          %p371 = pneg %p138
        $region46: #{tpu_custom_call.1} parent=43 // pred_check_branch
          %373 = sbr.rel (%p371) target = $region48
        $region47: #{tpu_custom_call.1} parent=43 // pred_region
          %s374 = sand.u32 %s123, 1
          %s375 = scalar_lea.sflag [#allocation4], %s374
          %s376 = sand.u32 %s123, 1
          %s377 = smul.addr %s376, 64
          %s378 = scalar_lea.vmem [#allocation5], %s377
          %380 = dma.done %s375, 1024
        $region48: #{tpu_custom_call.1} parent=43 // pred_fallthru
          _
      $region44: #{tpu_custom_call.1} parent=5 // pred_fallthru
        _
    $region6: #{tpu_custom_call.1} parent=1 // loop_footer
      %s19 = sadd.s32 1, %s15
    $region7: #{tpu_custom_call.1} parent=1 // loop_footer_branch
      %14 = sbr.rel target = $region3
    $region8: #{tpu_custom_call.1} parent=1 // loop_exit
      _
    %381 = vsyncpa [#allocation3], 1
    %s382 = scalar_lea.sflag [#allocation3], 1
    %383 = vsyncpa %s382, 1
    %384 = vsyncpa [#allocation4], 1
    %s385 = scalar_lea.sflag [#allocation4], 1
    %386 = vsyncpa %s385, 1

</llo_original>
